<compile_context>
chip_gen: v7x
topology: tpu7x:2x2x1
jax: 0.10.0
libtpu: 0.0.40
codegen_flags: <defaults>
</compile_context>

<pallas_src>
import jax
import jax.numpy as jnp
from jax import lax
from jax.experimental import pallas as pl
from jax.experimental.pallas import tpu as pltpu


def fastrp_kernel(idx_ref, scal_ref, mix_ref, feat_hbm, out_ref, rows, sem):
    # idx_ref : SMEM (2P,)      int32  gather indices (idx_i ++ idx_j), pre-clamped
    # scal_ref: SMEM (2,)       f32    [intercept, slope]
    # mix_ref : VMEM (D, F*D)   f32    mix_t[d, f*D+d'] = softmax(w)[f] * (d == d')
    # feat_hbm: HBM  (N, F*D)   f32    relayouted row-normalized features (never fully loaded)
    # out_ref : VMEM (1, P)     f32    probabilities (lane-major)
    # rows    : VMEM (2P, F*D)  f32    gathered author rows (lane-dense: F*D = 128)
    # sem     : DMA semaphore          shared by all 2P row-gather copies
    TWO_P = rows.shape[0]
    P = TWO_P // 2

    # Deep prefetch: issue every row-gather DMA before waiting on any of them.
    # All SMEM index reads / DMA address computations happen here, ahead of the
    # wait, so the scalar pipeline never stalls on sst->sld forwarding breaks.
    for r in range(TWO_P):  # 2P is a small trace-time constant -> static unroll
        pltpu.make_async_copy(
            feat_hbm.at[pl.ds(idx_ref[r], 1), :],   # (1, F*D) contiguous row in HBM
            rows.at[pl.ds(r, 1), :],                # (1, F*D) row slot in VMEM
            sem,
        ).start()

    # Single wait for the whole gathered buffer: each copy above signals `sem`
    # with its byte count on completion, so one wait sized to all of `rows`
    # (2P * F*D * 4 bytes) is equivalent to 2P per-row waits.  `rows` is used on
    # both sides of the descriptor purely to give the wait the right size; no
    # copy is ever started from this descriptor.
    pltpu.make_async_copy(rows, rows, sem).wait()

    # gather-then-mix == mix-then-gather (both linear): one MXU matmul with the
    # softmax weights folded into mix_ref produces the mixed embeddings of the
    # pair rows, already transposed to (D, 2P) so the distance reduction lands
    # directly in the lane-major output layout.
    mixed_t = lax.dot_general(
        mix_ref[...], rows[...],
        dimension_numbers=(((1,), (1,)), ((), ())),     # (D,FD) . (2P,FD)^T -> (D,2P)
        precision=lax.Precision.HIGHEST,
        preferred_element_type=jnp.float32,
    )

    diff_t = mixed_t[:, :P] - mixed_t[:, P:]                       # (D, P)
    dist_sq = jnp.sum(diff_t * diff_t, axis=0, keepdims=True)      # (1, P) lane-major
    logits = scal_ref[0] - scal_ref[1] * dist_sq                   # intercept - slope * d2
    out_ref[...] = jax.nn.sigmoid(logits)


def fastrp_forward(features, feature_weights, intercept, slope, idx_i, idx_j):
    features = features.astype(jnp.float32)
    F_total, N, D = features.shape
    P = int(idx_i.shape[0])
    TWO_P = 2 * P
    FD = F_total * D

    # Host-side relayout (F, N, D) -> (N, F*D): a single gather index now pulls
    # every feature slab's row with one contiguous F*D*4-byte DMA.
    feat_nfd = jnp.transpose(features, (1, 0, 2)).reshape(N, FD)

    # softmax over the flattened feature_weights (matches torch), folded into a
    # (D, F*D) mix matrix so gather + weighted slab-sum is one MXU matmul:
    #   mix_t[d, f*D + d'] = softmax(w)[f] * (d == d')
    w = jax.nn.softmax(feature_weights.reshape(-1)).astype(jnp.float32)          # (F,)
    mix_t = (w[None, :, None] * jnp.eye(D, dtype=jnp.float32)[:, None, :]).reshape(D, FD)

    scal = jnp.stack([jnp.asarray(intercept, jnp.float32),
                      jnp.asarray(slope, jnp.float32)])                           # (2,)

    # Concatenated gather indices; clamp so an untrusted index cannot cause an
    # out-of-bounds DMA (torch indexing would raise instead of clamping).
    idx = jnp.clip(jnp.concatenate([idx_i, idx_j]).astype(jnp.int32), 0, N - 1)   # (2P,)

    out = pl.pallas_call(
        fastrp_kernel,
        out_shape=jax.ShapeDtypeStruct((1, P), jnp.float32),
        in_specs=[
            pl.BlockSpec(memory_space=pltpu.MemorySpace.SMEM),   # idx   (2P,)    int32
            pl.BlockSpec(memory_space=pltpu.MemorySpace.SMEM),   # scal  (2,)     f32
            pl.BlockSpec(memory_space=pltpu.MemorySpace.VMEM),   # mix_t (D, F*D) f32
            pl.BlockSpec(memory_space=pl.ANY),                   # features stay in HBM
        ],
        out_specs=pl.BlockSpec(memory_space=pltpu.MemorySpace.VMEM),
        scratch_shapes=[
            pltpu.VMEM((TWO_P, FD), jnp.float32),                # gathered rows (lane-dense)
            pltpu.SemaphoreType.DMA,                             # one sem shared by all copies
        ],
        # VMEM footprint (rows 8 KiB + mix 16 KiB + out) is far below every
        # generation's default scoped-VMEM limit; no vmem_limit_bytes needed.
    )(idx, scal, mix_t, feat_nfd)
    return out[0]                                                 # (P,)


if __name__ == "__main__":
    key = jax.random.PRNGKey(0)

    # small shapes consistent with the module
    n_authors, dim = 64, 32
    meta_paths = ["AA", "APA"]
    num_powers = 2
    F_total = len(meta_paths) * num_powers
    P = 8  # number of (i, j) pairs

    k1, k2, k3 = jax.random.split(key, 3)

    # deterministic synthetic features: stack of F (N, D) embeddings, row L2-normalized
    # (mirrors F.normalize(current_U_tensor, p=2, dim=1) in __init__)
    feats = jax.random.normal(k1, (F_total, n_authors, dim), dtype=jnp.float32)
    feats = feats / jnp.linalg.norm(feats, axis=-1, keepdims=True)

    # parameters exactly as in __init__
    feature_weights = jnp.ones((len(meta_paths), num_powers), dtype=jnp.float32)
    intercept = jnp.float32(0.0)
    slope = jnp.float32(1.0)

    idx_i = jax.random.randint(k2, (P,), 0, n_authors, dtype=jnp.int32)
    idx_j = jax.random.randint(k3, (P,), 0, n_authors, dtype=jnp.int32)

    probs = jax.block_until_ready(
        fastrp_forward(feats, feature_weights, intercept, slope, idx_i, idx_j))

    # plain-JAX reference (exact f32 elementwise path, no matmul-precision ambiguity)
    w_ref = jax.nn.softmax(feature_weights.reshape(-1))
    E_ref = (w_ref[:, None, None] * feats).sum(axis=0)
    dist_ref = ((E_ref[idx_i] - E_ref[idx_j]) ** 2).sum(axis=1)
    ref = jax.nn.sigmoid(intercept - slope * dist_ref)

    assert probs.shape == (P,)
    assert jnp.allclose(probs, ref, atol=2e-5, rtol=2e-5), (probs, ref)
    print("KERNEL_OK")
</pallas_src>

<mosaic_0001>
module attributes {stable_mosaic.version = 11 : i64} {
  func.func @fastrp_kernel(%arg0: memref<16xi32, #tpu.memory_space<smem>>, %arg1: memref<2xf32, #tpu.memory_space<smem>>, %arg2: memref<32x128xf32, #tpu.memory_space<vmem>>, %arg3: memref<64x128xf32, #tpu.memory_space<any>>, %arg4: memref<1x8xf32, #tpu.memory_space<vmem>>, %arg5: memref<16x128xf32, #tpu.memory_space<vmem>>, %arg6: memref<!tpu.dma_semaphore, #tpu.memory_space<semaphore_mem>>) attributes {dimension_semantics = [], scalar_prefetch = 0 : i64, scratch_operands = 2 : i64, tpu.core_type = #tpu.core_type<tc>} {
    %c0 = arith.constant 0 : index
    %0 = memref.load %arg0[%c0] : memref<16xi32, #tpu.memory_space<smem>>
    %c0_i32 = arith.constant 0 : i32
    %1 = tpu.memref_slice %arg3[%0, %c0_i32] : memref<64x128xf32, #tpu.memory_space<any>> -> memref<1x128xf32, #tpu.memory_space<any>>
    %c0_i32_0 = arith.constant 0 : i32
    %c0_i32_1 = arith.constant 0 : i32
    %2 = tpu.memref_slice %arg5[%c0_i32_0, %c0_i32_1] : memref<16x128xf32, #tpu.memory_space<vmem>> -> memref<1x128xf32, #tpu.memory_space<vmem>>
    tpu.enqueue_dma source(%1 : memref<1x128xf32, #tpu.memory_space<any>>) target(%2 : memref<1x128xf32, #tpu.memory_space<vmem>>) target_semaphore(%arg6 : memref<!tpu.dma_semaphore, #tpu.memory_space<semaphore_mem>>)
    %c1 = arith.constant 1 : index
    %3 = memref.load %arg0[%c1] : memref<16xi32, #tpu.memory_space<smem>>
    %c0_i32_2 = arith.constant 0 : i32
    %4 = tpu.memref_slice %arg3[%3, %c0_i32_2] : memref<64x128xf32, #tpu.memory_space<any>> -> memref<1x128xf32, #tpu.memory_space<any>>
    %c1_i32 = arith.constant 1 : i32
    %c0_i32_3 = arith.constant 0 : i32
    %5 = tpu.memref_slice %arg5[%c1_i32, %c0_i32_3] : memref<16x128xf32, #tpu.memory_space<vmem>> -> memref<1x128xf32, #tpu.memory_space<vmem>>
    tpu.enqueue_dma source(%4 : memref<1x128xf32, #tpu.memory_space<any>>) target(%5 : memref<1x128xf32, #tpu.memory_space<vmem>>) target_semaphore(%arg6 : memref<!tpu.dma_semaphore, #tpu.memory_space<semaphore_mem>>)
    %c2 = arith.constant 2 : index
    %6 = memref.load %arg0[%c2] : memref<16xi32, #tpu.memory_space<smem>>
    %c0_i32_4 = arith.constant 0 : i32
    %7 = tpu.memref_slice %arg3[%6, %c0_i32_4] : memref<64x128xf32, #tpu.memory_space<any>> -> memref<1x128xf32, #tpu.memory_space<any>>
    %c2_i32 = arith.constant 2 : i32
    %c0_i32_5 = arith.constant 0 : i32
    %8 = tpu.memref_slice %arg5[%c2_i32, %c0_i32_5] : memref<16x128xf32, #tpu.memory_space<vmem>> -> memref<1x128xf32, #tpu.memory_space<vmem>>
    tpu.enqueue_dma source(%7 : memref<1x128xf32, #tpu.memory_space<any>>) target(%8 : memref<1x128xf32, #tpu.memory_space<vmem>>) target_semaphore(%arg6 : memref<!tpu.dma_semaphore, #tpu.memory_space<semaphore_mem>>)
    %c3 = arith.constant 3 : index
    %9 = memref.load %arg0[%c3] : memref<16xi32, #tpu.memory_space<smem>>
    %c0_i32_6 = arith.constant 0 : i32
    %10 = tpu.memref_slice %arg3[%9, %c0_i32_6] : memref<64x128xf32, #tpu.memory_space<any>> -> memref<1x128xf32, #tpu.memory_space<any>>
    %c3_i32 = arith.constant 3 : i32
    %c0_i32_7 = arith.constant 0 : i32
    %11 = tpu.memref_slice %arg5[%c3_i32, %c0_i32_7] : memref<16x128xf32, #tpu.memory_space<vmem>> -> memref<1x128xf32, #tpu.memory_space<vmem>>
    tpu.enqueue_dma source(%10 : memref<1x128xf32, #tpu.memory_space<any>>) target(%11 : memref<1x128xf32, #tpu.memory_space<vmem>>) target_semaphore(%arg6 : memref<!tpu.dma_semaphore, #tpu.memory_space<semaphore_mem>>)
    %c4 = arith.constant 4 : index
    %12 = memref.load %arg0[%c4] : memref<16xi32, #tpu.memory_space<smem>>
    %c0_i32_8 = arith.constant 0 : i32
    %13 = tpu.memref_slice %arg3[%12, %c0_i32_8] : memref<64x128xf32, #tpu.memory_space<any>> -> memref<1x128xf32, #tpu.memory_space<any>>
    %c4_i32 = arith.constant 4 : i32
    %c0_i32_9 = arith.constant 0 : i32
    %14 = tpu.memref_slice %arg5[%c4_i32, %c0_i32_9] : memref<16x128xf32, #tpu.memory_space<vmem>> -> memref<1x128xf32, #tpu.memory_space<vmem>>
    tpu.enqueue_dma source(%13 : memref<1x128xf32, #tpu.memory_space<any>>) target(%14 : memref<1x128xf32, #tpu.memory_space<vmem>>) target_semaphore(%arg6 : memref<!tpu.dma_semaphore, #tpu.memory_space<semaphore_mem>>)
    %c5 = arith.constant 5 : index
    %15 = memref.load %arg0[%c5] : memref<16xi32, #tpu.memory_space<smem>>
    %c0_i32_10 = arith.constant 0 : i32
    %16 = tpu.memref_slice %arg3[%15, %c0_i32_10] : memref<64x128xf32, #tpu.memory_space<any>> -> memref<1x128xf32, #tpu.memory_space<any>>
    %c5_i32 = arith.constant 5 : i32
    %c0_i32_11 = arith.constant 0 : i32
    %17 = tpu.memref_slice %arg5[%c5_i32, %c0_i32_11] : memref<16x128xf32, #tpu.memory_space<vmem>> -> memref<1x128xf32, #tpu.memory_space<vmem>>
    tpu.enqueue_dma source(%16 : memref<1x128xf32, #tpu.memory_space<any>>) target(%17 : memref<1x128xf32, #tpu.memory_space<vmem>>) target_semaphore(%arg6 : memref<!tpu.dma_semaphore, #tpu.memory_space<semaphore_mem>>)
    %c6 = arith.constant 6 : index
    %18 = memref.load %arg0[%c6] : memref<16xi32, #tpu.memory_space<smem>>
    %c0_i32_12 = arith.constant 0 : i32
    %19 = tpu.memref_slice %arg3[%18, %c0_i32_12] : memref<64x128xf32, #tpu.memory_space<any>> -> memref<1x128xf32, #tpu.memory_space<any>>
    %c6_i32 = arith.constant 6 : i32
    %c0_i32_13 = arith.constant 0 : i32
    %20 = tpu.memref_slice %arg5[%c6_i32, %c0_i32_13] : memref<16x128xf32, #tpu.memory_space<vmem>> -> memref<1x128xf32, #tpu.memory_space<vmem>>
    tpu.enqueue_dma source(%19 : memref<1x128xf32, #tpu.memory_space<any>>) target(%20 : memref<1x128xf32, #tpu.memory_space<vmem>>) target_semaphore(%arg6 : memref<!tpu.dma_semaphore, #tpu.memory_space<semaphore_mem>>)
    %c7 = arith.constant 7 : index
    %21 = memref.load %arg0[%c7] : memref<16xi32, #tpu.memory_space<smem>>
    %c0_i32_14 = arith.constant 0 : i32
    %22 = tpu.memref_slice %arg3[%21, %c0_i32_14] : memref<64x128xf32, #tpu.memory_space<any>> -> memref<1x128xf32, #tpu.memory_space<any>>
    %c7_i32 = arith.constant 7 : i32
    %c0_i32_15 = arith.constant 0 : i32
    %23 = tpu.memref_slice %arg5[%c7_i32, %c0_i32_15] : memref<16x128xf32, #tpu.memory_space<vmem>> -> memref<1x128xf32, #tpu.memory_space<vmem>>
    tpu.enqueue_dma source(%22 : memref<1x128xf32, #tpu.memory_space<any>>) target(%23 : memref<1x128xf32, #tpu.memory_space<vmem>>) target_semaphore(%arg6 : memref<!tpu.dma_semaphore, #tpu.memory_space<semaphore_mem>>)
    %c8 = arith.constant 8 : index
    %24 = memref.load %arg0[%c8] : memref<16xi32, #tpu.memory_space<smem>>
    %c0_i32_16 = arith.constant 0 : i32
    %25 = tpu.memref_slice %arg3[%24, %c0_i32_16] : memref<64x128xf32, #tpu.memory_space<any>> -> memref<1x128xf32, #tpu.memory_space<any>>
    %c8_i32 = arith.constant 8 : i32
    %c0_i32_17 = arith.constant 0 : i32
    %26 = tpu.memref_slice %arg5[%c8_i32, %c0_i32_17] : memref<16x128xf32, #tpu.memory_space<vmem>> -> memref<1x128xf32, #tpu.memory_space<vmem>>
    tpu.enqueue_dma source(%25 : memref<1x128xf32, #tpu.memory_space<any>>) target(%26 : memref<1x128xf32, #tpu.memory_space<vmem>>) target_semaphore(%arg6 : memref<!tpu.dma_semaphore, #tpu.memory_space<semaphore_mem>>)
    %c9 = arith.constant 9 : index
    %27 = memref.load %arg0[%c9] : memref<16xi32, #tpu.memory_space<smem>>
    %c0_i32_18 = arith.constant 0 : i32
    %28 = tpu.memref_slice %arg3[%27, %c0_i32_18] : memref<64x128xf32, #tpu.memory_space<any>> -> memref<1x128xf32, #tpu.memory_space<any>>
    %c9_i32 = arith.constant 9 : i32
    %c0_i32_19 = arith.constant 0 : i32
    %29 = tpu.memref_slice %arg5[%c9_i32, %c0_i32_19] : memref<16x128xf32, #tpu.memory_space<vmem>> -> memref<1x128xf32, #tpu.memory_space<vmem>>
    tpu.enqueue_dma source(%28 : memref<1x128xf32, #tpu.memory_space<any>>) target(%29 : memref<1x128xf32, #tpu.memory_space<vmem>>) target_semaphore(%arg6 : memref<!tpu.dma_semaphore, #tpu.memory_space<semaphore_mem>>)
    %c10 = arith.constant 10 : index
    %30 = memref.load %arg0[%c10] : memref<16xi32, #tpu.memory_space<smem>>
    %c0_i32_20 = arith.constant 0 : i32
    %31 = tpu.memref_slice %arg3[%30, %c0_i32_20] : memref<64x128xf32, #tpu.memory_space<any>> -> memref<1x128xf32, #tpu.memory_space<any>>
    %c10_i32 = arith.constant 10 : i32
    %c0_i32_21 = arith.constant 0 : i32
    %32 = tpu.memref_slice %arg5[%c10_i32, %c0_i32_21] : memref<16x128xf32, #tpu.memory_space<vmem>> -> memref<1x128xf32, #tpu.memory_space<vmem>>
    tpu.enqueue_dma source(%31 : memref<1x128xf32, #tpu.memory_space<any>>) target(%32 : memref<1x128xf32, #tpu.memory_space<vmem>>) target_semaphore(%arg6 : memref<!tpu.dma_semaphore, #tpu.memory_space<semaphore_mem>>)
    %c11 = arith.constant 11 : index
    %33 = memref.load %arg0[%c11] : memref<16xi32, #tpu.memory_space<smem>>
    %c0_i32_22 = arith.constant 0 : i32
    %34 = tpu.memref_slice %arg3[%33, %c0_i32_22] : memref<64x128xf32, #tpu.memory_space<any>> -> memref<1x128xf32, #tpu.memory_space<any>>
    %c11_i32 = arith.constant 11 : i32
    %c0_i32_23 = arith.constant 0 : i32
    %35 = tpu.memref_slice %arg5[%c11_i32, %c0_i32_23] : memref<16x128xf32, #tpu.memory_space<vmem>> -> memref<1x128xf32, #tpu.memory_space<vmem>>
    tpu.enqueue_dma source(%34 : memref<1x128xf32, #tpu.memory_space<any>>) target(%35 : memref<1x128xf32, #tpu.memory_space<vmem>>) target_semaphore(%arg6 : memref<!tpu.dma_semaphore, #tpu.memory_space<semaphore_mem>>)
    %c12 = arith.constant 12 : index
    %36 = memref.load %arg0[%c12] : memref<16xi32, #tpu.memory_space<smem>>
    %c0_i32_24 = arith.constant 0 : i32
    %37 = tpu.memref_slice %arg3[%36, %c0_i32_24] : memref<64x128xf32, #tpu.memory_space<any>> -> memref<1x128xf32, #tpu.memory_space<any>>
    %c12_i32 = arith.constant 12 : i32
    %c0_i32_25 = arith.constant 0 : i32
    %38 = tpu.memref_slice %arg5[%c12_i32, %c0_i32_25] : memref<16x128xf32, #tpu.memory_space<vmem>> -> memref<1x128xf32, #tpu.memory_space<vmem>>
    tpu.enqueue_dma source(%37 : memref<1x128xf32, #tpu.memory_space<any>>) target(%38 : memref<1x128xf32, #tpu.memory_space<vmem>>) target_semaphore(%arg6 : memref<!tpu.dma_semaphore, #tpu.memory_space<semaphore_mem>>)
    %c13 = arith.constant 13 : index
    %39 = memref.load %arg0[%c13] : memref<16xi32, #tpu.memory_space<smem>>
    %c0_i32_26 = arith.constant 0 : i32
    %40 = tpu.memref_slice %arg3[%39, %c0_i32_26] : memref<64x128xf32, #tpu.memory_space<any>> -> memref<1x128xf32, #tpu.memory_space<any>>
    %c13_i32 = arith.constant 13 : i32
    %c0_i32_27 = arith.constant 0 : i32
    %41 = tpu.memref_slice %arg5[%c13_i32, %c0_i32_27] : memref<16x128xf32, #tpu.memory_space<vmem>> -> memref<1x128xf32, #tpu.memory_space<vmem>>
    tpu.enqueue_dma source(%40 : memref<1x128xf32, #tpu.memory_space<any>>) target(%41 : memref<1x128xf32, #tpu.memory_space<vmem>>) target_semaphore(%arg6 : memref<!tpu.dma_semaphore, #tpu.memory_space<semaphore_mem>>)
    %c14 = arith.constant 14 : index
    %42 = memref.load %arg0[%c14] : memref<16xi32, #tpu.memory_space<smem>>
    %c0_i32_28 = arith.constant 0 : i32
    %43 = tpu.memref_slice %arg3[%42, %c0_i32_28] : memref<64x128xf32, #tpu.memory_space<any>> -> memref<1x128xf32, #tpu.memory_space<any>>
    %c14_i32 = arith.constant 14 : i32
    %c0_i32_29 = arith.constant 0 : i32
    %44 = tpu.memref_slice %arg5[%c14_i32, %c0_i32_29] : memref<16x128xf32, #tpu.memory_space<vmem>> -> memref<1x128xf32, #tpu.memory_space<vmem>>
    tpu.enqueue_dma source(%43 : memref<1x128xf32, #tpu.memory_space<any>>) target(%44 : memref<1x128xf32, #tpu.memory_space<vmem>>) target_semaphore(%arg6 : memref<!tpu.dma_semaphore, #tpu.memory_space<semaphore_mem>>)
    %c15 = arith.constant 15 : index
    %45 = memref.load %arg0[%c15] : memref<16xi32, #tpu.memory_space<smem>>
    %c0_i32_30 = arith.constant 0 : i32
    %46 = tpu.memref_slice %arg3[%45, %c0_i32_30] : memref<64x128xf32, #tpu.memory_space<any>> -> memref<1x128xf32, #tpu.memory_space<any>>
    %c15_i32 = arith.constant 15 : i32
    %c0_i32_31 = arith.constant 0 : i32
    %47 = tpu.memref_slice %arg5[%c15_i32, %c0_i32_31] : memref<16x128xf32, #tpu.memory_space<vmem>> -> memref<1x128xf32, #tpu.memory_space<vmem>>
    tpu.enqueue_dma source(%46 : memref<1x128xf32, #tpu.memory_space<any>>) target(%47 : memref<1x128xf32, #tpu.memory_space<vmem>>) target_semaphore(%arg6 : memref<!tpu.dma_semaphore, #tpu.memory_space<semaphore_mem>>)
    tpu.wait_dma2 semaphore(%arg6 : memref<!tpu.dma_semaphore, #tpu.memory_space<semaphore_mem>>) src(%arg5 : memref<16x128xf32, #tpu.memory_space<vmem>>) dst(%arg5 : memref<16x128xf32, #tpu.memory_space<vmem>>)
    %c0_32 = arith.constant 0 : index
    %c0_33 = arith.constant 0 : index
    %48 = vector.load %arg2[%c0_32, %c0_33] : memref<32x128xf32, #tpu.memory_space<vmem>>, vector<32x128xf32>
    %c0_34 = arith.constant 0 : index
    %c0_35 = arith.constant 0 : index
    %49 = vector.load %arg5[%c0_34, %c0_35] : memref<16x128xf32, #tpu.memory_space<vmem>>, vector<16x128xf32>
    %cst = arith.constant dense<0.000000e+00> : vector<32x16xf32>
    %50 = tpu.matmul %48, %49, %cst {dimension_numbers = #tpu.dot_dimension_numbers<[1], [1], [0], [0], [0, 0, 1, 0], [], []>, precision = #tpu.contract_precision<fp32>} : vector<32x128xf32>, vector<16x128xf32>, vector<32x16xf32> -> vector<32x16xf32>
    %51 = vector.extract_strided_slice %50 {offsets = [0, 0], sizes = [32, 8], strides = [1, 1]} : vector<32x16xf32> to vector<32x8xf32>
    %52 = vector.extract_strided_slice %50 {offsets = [0, 8], sizes = [32, 8], strides = [1, 1]} : vector<32x16xf32> to vector<32x8xf32>
    %53 = arith.subf %51, %52 : vector<32x8xf32>
    %54 = arith.mulf %53, %53 : vector<32x8xf32>
    %cst_36 = arith.constant dense<0.000000e+00> : vector<8xf32>
    %55 = vector.multi_reduction <add>, %54, %cst_36 [0] : vector<32x8xf32> to vector<8xf32>
    %56 = vector.shape_cast %55 : vector<8xf32> to vector<1x8xf32>
    %c0_37 = arith.constant 0 : index
    %57 = memref.load %arg1[%c0_37] : memref<2xf32, #tpu.memory_space<smem>>
    %c1_38 = arith.constant 1 : index
    %58 = memref.load %arg1[%c1_38] : memref<2xf32, #tpu.memory_space<smem>>
    %59 = vector.broadcast %58 : f32 to vector<1x8xf32>
    %60 = arith.mulf %59, %56 : vector<1x8xf32>
    %61 = vector.broadcast %57 : f32 to vector<1x8xf32>
    %62 = arith.subf %61, %60 : vector<1x8xf32>
    %63 = arith.negf %62 : vector<1x8xf32>
    %64 = math.exp %63 : vector<1x8xf32>
    %cst_39 = arith.constant 1.000000e+00 : f32
    %65 = vector.broadcast %cst_39 : f32 to vector<1x8xf32>
    %66 = arith.addf %65, %64 : vector<1x8xf32>
    %67 = arith.divf %65, %66 : vector<1x8xf32>
    %c0_40 = arith.constant 0 : index
    %c0_41 = arith.constant 0 : index
    %68 = vector.load %arg4[%c0_40, %c0_41] : memref<1x8xf32, #tpu.memory_space<vmem>>, vector<1x8xf32>
    tpu.vector_store %arg4[%c0_40, %c0_41], %67 {strides = array<i32>} : memref<1x8xf32, #tpu.memory_space<vmem>>, vector<1x8xf32>,
    return
  }
}

</mosaic_0001>

<llo_original>
// kernel: tpu_custom_call.1
$region0: #{tpu_custom_call.1}
  #allocation0 [shape = 'u32[]', space=smem, size = 0x4, offset = 0x4, fixed_abs, tag = 'smem constant byte address 0x4 - core index']
  #allocation1 [shape = 'u32[144,128]{1,0:T(1,128)}', space=vmem, size = 0x12000, scoped, tag = 'internal scratch']
  #allocation2 [shape = 'f32[16,128]{1,0:T(8,128)}', space=vmem, size = 0x2000, scoped, tag = 'scratch operand']
  #allocation3 [shape = 's32[1]{0}', space=sflag, size = 0x4, scoped, tag = 'scratch operand']
  #allocation12 [shape = 's32[]', space=sflag, size = 0x4, offset = 0, fixed_abs, tag = 'sflag constant byte address 0x0 - dummy sync flag']
  #allocation13 [shape = 's32[]', space=sflag, size = 0x4, offset = 0, fixed_abs, tag = 'sflag constant byte address 0x0 - dummy sync flag']
  #allocation14 [shape = 'u32[]', space=smem, size = 0x4, offset = 0x44, fixed_abs, tag = 'smem constant byte address 0x44 - assertion arg 0']
  #allocation15 [shape = 'u32[]', space=smem, size = 0x4, offset = 0x48, fixed_abs, tag = 'smem constant byte address 0x48 - assertion arg 1']
  #allocation16 [shape = 's32[]', space=sflag, size = 0x4, offset = 0, fixed_abs, tag = 'sflag constant byte address 0x0 - dummy sync flag']
  #allocation17 [shape = 's32[]', space=sflag, size = 0x4, offset = 0, fixed_abs, tag = 'sflag constant byte address 0x0 - dummy sync flag']
  #allocation18 [shape = 's32[]', space=sflag, size = 0x4, offset = 0, fixed_abs, tag = 'sflag constant byte address 0x0 - dummy sync flag']
  #allocation19 [shape = 's32[]', space=sflag, size = 0x4, offset = 0, fixed_abs, tag = 'sflag constant byte address 0x0 - dummy sync flag']
  #allocation20 [shape = 's32[]', space=sflag, size = 0x4, offset = 0, fixed_abs, tag = 'sflag constant byte address 0x0 - dummy sync flag']
  #allocation21 [shape = 's32[]', space=sflag, size = 0x4, offset = 0, fixed_abs, tag = 'sflag constant byte address 0x0 - dummy sync flag']
  #allocation22 [shape = 's32[]', space=sflag, size = 0x4, offset = 0, fixed_abs, tag = 'sflag constant byte address 0x0 - dummy sync flag']
  #allocation23 [shape = 's32[]', space=sflag, size = 0x4, offset = 0, fixed_abs, tag = 'sflag constant byte address 0x0 - dummy sync flag']
  #allocation24 [shape = 's32[]', space=sflag, size = 0x4, offset = 0, fixed_abs, tag = 'sflag constant byte address 0x0 - dummy sync flag']
  #allocation25 [shape = 's32[]', space=sflag, size = 0x4, offset = 0, fixed_abs, tag = 'sflag constant byte address 0x0 - dummy sync flag']
  #allocation26 [shape = 's32[]', space=sflag, size = 0x4, offset = 0, fixed_abs, tag = 'sflag constant byte address 0x0 - dummy sync flag']
  #allocation27 [shape = 's32[]', space=sflag, size = 0x4, offset = 0, fixed_abs, tag = 'sflag constant byte address 0x0 - dummy sync flag']
  #allocation28 [shape = 's32[]', space=sflag, size = 0x4, offset = 0, fixed_abs, tag = 'sflag constant byte address 0x0 - dummy sync flag']
  #allocation29 [shape = 's32[]', space=sflag, size = 0x4, offset = 0, fixed_abs, tag = 'sflag constant byte address 0x0 - dummy sync flag']
  #allocation30 [shape = 's32[]', space=sflag, size = 0x4, offset = 0, fixed_abs, tag = 'sflag constant byte address 0x0 - dummy sync flag']
  #allocation31 [shape = 's32[]', space=sflag, size = 0x4, offset = 0, fixed_abs, tag = 'sflag constant byte address 0x0 - dummy sync flag']
  #allocation32 [shape = 's32[]', space=sflag, size = 0x4, offset = 0, fixed_abs, tag = 'sflag constant byte address 0x0 - dummy sync flag']
  #allocation33 [shape = 's32[]', space=sflag, size = 0x4, offset = 0, fixed_abs, tag = 'sflag constant byte address 0x0 - dummy sync flag']
  #allocation34 [shape = 's32[]', space=sflag, size = 0x4, offset = 0, fixed_abs, tag = 'sflag constant byte address 0x0 - dummy sync flag']
  #allocation35 [shape = 's32[]', space=sflag, size = 0x4, offset = 0, fixed_abs, tag = 'sflag constant byte address 0x0 - dummy sync flag']
  #allocation36 [shape = 's32[]', space=sflag, size = 0x4, offset = 0, fixed_abs, tag = 'sflag constant byte address 0x0 - dummy sync flag']
  #allocation37 [shape = 's32[]', space=sflag, size = 0x4, offset = 0, fixed_abs, tag = 'sflag constant byte address 0x0 - dummy sync flag']
  #allocation38 [shape = 's32[]', space=sflag, size = 0x4, offset = 0, fixed_abs, tag = 'sflag constant byte address 0x0 - dummy sync flag']
  #allocation39 [shape = 's32[]', space=sflag, size = 0x4, offset = 0, fixed_abs, tag = 'sflag constant byte address 0x0 - dummy sync flag']
  #allocation40 [shape = 's32[]', space=sflag, size = 0x4, offset = 0, fixed_abs, tag = 'sflag constant byte address 0x0 - dummy sync flag']
  #allocation41 [shape = 's32[]', space=sflag, size = 0x4, offset = 0, fixed_abs, tag = 'sflag constant byte address 0x0 - dummy sync flag']
  #allocation42 [shape = 's32[]', space=sflag, size = 0x4, offset = 0, fixed_abs, tag = 'sflag constant byte address 0x0 - dummy sync flag']
  #allocation43 [shape = 's32[]', space=sflag, size = 0x4, offset = 0, fixed_abs, tag = 'sflag constant byte address 0x0 - dummy sync flag']
  #allocation44 [shape = 's32[]', space=sflag, size = 0x4, offset = 0, fixed_abs, tag = 'sflag constant byte address 0x0 - dummy sync flag']
  #allocation45 [shape = 's32[]', space=sflag, size = 0x4, offset = 0, fixed_abs, tag = 'sflag constant byte address 0x0 - dummy sync flag']
  %s0 = inlined_call_operand.hbm [shape: s32[16], index: 0, kind: input, shape index: {}]
  %s1 = inlined_call_operand.vmem [shape: f32[2], index: 1, kind: input, shape index: {}]
  %s2 = inlined_call_operand.hbm [shape: f32[32,128], index: 2, kind: input, shape index: {}]
  %s3 = inlined_call_operand.hbm [shape: f32[64,128], index: 3, kind: input, shape index: {}]
  %s4 = inlined_call_operand.hbm [shape: f32[1,8], index: 4, kind: output, shape index: {}]
  %s5 = sld [smem:[#allocation0]]
  $region98: #{tpu_custom_call.1} parent=0
    _
  %s7 = ssub.s32 1, %s5
  %s8 = scalar_select 0, %s7, %s5
  $region1: #{tpu_custom_call.1} parent=0
    #allocation4 [shape = 'u8[512]{0}', space=smem, size = 0x200, scoped, tag = 'input window, operand 0, single buffered']
    #allocation5 [shape = 's32[1]{0}', space=sflag, size = 0x4, scoped, tag = 'scoped memory for tpu_custom_call.1']
    #allocation6 [shape = 's32[1]{0}', space=sflag, size = 0x4, scoped, tag = 'scoped memory for tpu_custom_call.1']
    #allocation7 [shape = 's32[1]{0}', space=sflag, size = 0x4, scoped, tag = 'scoped memory for tpu_custom_call.1']
    #allocation8 [shape = 's32[1]{0}', space=sflag, size = 0x4, scoped, tag = 'scoped memory for tpu_custom_call.1']
    #allocation9 [shape = 'u8[512]{0}', space=smem, size = 0x200, scoped, tag = 'input window, operand 1, single buffered']
    #allocation10 [shape = 'u8[16384]{0}', space=vmem, size = 0x4000, scoped, tag = 'input window, operand 2, single buffered']
    #allocation11 [shape = 'u8[512]{0}', space=vmem, size = 0x400, scoped, tag = 'output window, operand 0, single buffered']
    %9 = vsyncpa [#allocation7], 0
    %10 = vsyncpa [#allocation8], 0
    %11 = vsyncpa [#allocation5], 0
    %12 = vsyncpa [#allocation6], 0
    // Predicated region
    $region2: #{tpu_custom_call.1} parent=1 // pred_check
      _
    $region3: #{tpu_custom_call.1} parent=1 // pred_check_branch
      %14 = sbr.rel (0) target = $region5
    $region4: #{tpu_custom_call.1} parent=1 // pred_region
      %s16 = ssub.s32 16, 16
      %17 = vsyncadd [#allocation7], %s16
      %20 = dma.hbm_to_smem %s0, 16, [#allocation4], [#allocation7]
    $region5: #{tpu_custom_call.1} parent=1 // pred_fallthru
      _
    // Predicated region
    $region6: #{tpu_custom_call.1} parent=1 // pred_check
      _
    $region7: #{tpu_custom_call.1} parent=1 // pred_check_branch
      %22 = sbr.rel (0) target = $region9
    $region8: #{tpu_custom_call.1} parent=1 // pred_region
      %s24 = ssub.s32 16, 16
      %25 = vsyncadd [#allocation8], %s24
      %s27 = sshll.u32 %s1, 4
      %s28 = int_to_ptr.vmem [resolvable:$true] %s27
      %30 = dma.vmem_to_smem %s28, 16, [#allocation9], [#allocation8]
    $region9: #{tpu_custom_call.1} parent=1 // pred_fallthru
      _
    // Predicated region
    $region10: #{tpu_custom_call.1} parent=1 // pred_check
      _
    $region11: #{tpu_custom_call.1} parent=1 // pred_check_branch
      %32 = sbr.rel (0) target = $region13
    $region12: #{tpu_custom_call.1} parent=1 // pred_region
      %s34 = ssub.s32 512, 512
      %35 = vsyncadd [#allocation5], %s34
      %s36 = sshll.u32 [#allocation10], 4
      %s37 = int_to_ptr.vmem [resolvable:$true] %s36
      %42 = dma.hbm_to_vmem [thread:$0]  %s2, 512, %s37, [#allocation5], 128, 128, 8
    $region13: #{tpu_custom_call.1} parent=1 // pred_fallthru
      _
    // Predicated region
    $region14: #{tpu_custom_call.1} parent=1 // pred_check
      _
    $region15: #{tpu_custom_call.1} parent=1 // pred_check_branch
      %44 = sbr.rel (0) target = $region17
    $region16: #{tpu_custom_call.1} parent=1 // pred_region
      %45 = dma.done [#allocation7], 16
    $region17: #{tpu_custom_call.1} parent=1 // pred_fallthru
      _
    // Predicated region
    $region18: #{tpu_custom_call.1} parent=1 // pred_check
      _
    $region19: #{tpu_custom_call.1} parent=1 // pred_check_branch
      %47 = sbr.rel (0) target = $region21
    $region20: #{tpu_custom_call.1} parent=1 // pred_region
      %48 = dma.done [#allocation8], 16
    $region21: #{tpu_custom_call.1} parent=1 // pred_fallthru
      _
    // Predicated region
    $region22: #{tpu_custom_call.1} parent=1 // pred_check
      _
    $region23: #{tpu_custom_call.1} parent=1 // pred_check_branch
      %50 = sbr.rel (0) target = $region25
    $region24: #{tpu_custom_call.1} parent=1 // pred_region
      %51 = dma.done [#allocation5], 512
    $region25: #{tpu_custom_call.1} parent=1 // pred_fallthru
      _
    %52 = sfence
    %s53 = sld [smem:[#allocation4]]
    %s54 = smul.addr %s53, 16
    %s55 = scalar_lea.hbm %s3, %s54
    // Predicated region
    $region26: #{tpu_custom_call.1} parent=1 // pred_check
      _
    $region27: #{tpu_custom_call.1} parent=1 // pred_check_branch
      %57 = sbr.rel target = $region29
    $region28: #{tpu_custom_call.1} parent=1 // pred_region
      %58 = sst [smem:[#allocation14]] [#allocation13]
      %59 = sst [smem:[#allocation15]] [#allocation12]
    $region29: #{tpu_custom_call.1} parent=1 // pred_fallthru
      _
    %61 = shalt.err (0)
    %s63 = sshll.u32 [#allocation2], 4
    %s64 = int_to_ptr.vmem [resolvable:$true] %s63
    %66 = dma.hbm_to_vmem [thread:$0]  %s55, 16, %s64, [#allocation3]
    %s67 = sld [smem:[#allocation4 + $0x1]]
    %s68 = smul.addr %s67, 16
    %s69 = scalar_lea.hbm %s3, %s68
    %s70 = scalar_lea.vmem [#allocation2], 1
    // Predicated region
    $region30: #{tpu_custom_call.1} parent=1 // pred_check
      _
    $region31: #{tpu_custom_call.1} parent=1 // pred_check_branch
      %72 = sbr.rel target = $region33
    $region32: #{tpu_custom_call.1} parent=1 // pred_region
      %73 = sst [smem:[#allocation14]] [#allocation17]
      %74 = sst [smem:[#allocation15]] [#allocation16]
    $region33: #{tpu_custom_call.1} parent=1 // pred_fallthru
      _
    %76 = shalt.err (0)
    %s78 = sshll.u32 %s70, 4
    %s79 = int_to_ptr.vmem [resolvable:$true] %s78
    %81 = dma.hbm_to_vmem [thread:$0]  %s69, 16, %s79, [#allocation3]
    %s82 = sld [smem:[#allocation4 + $0x2]]
    %s83 = smul.addr %s82, 16
    %s84 = scalar_lea.hbm %s3, %s83
    %s85 = scalar_lea.vmem [#allocation2], 2
    // Predicated region
    $region34: #{tpu_custom_call.1} parent=1 // pred_check
      _
    $region35: #{tpu_custom_call.1} parent=1 // pred_check_branch
      %87 = sbr.rel target = $region37
    $region36: #{tpu_custom_call.1} parent=1 // pred_region
      %88 = sst [smem:[#allocation14]] [#allocation19]
      %89 = sst [smem:[#allocation15]] [#allocation18]
    $region37: #{tpu_custom_call.1} parent=1 // pred_fallthru
      _
    %91 = shalt.err (0)
    %s93 = sshll.u32 %s85, 4
    %s94 = int_to_ptr.vmem [resolvable:$true] %s93
    %96 = dma.hbm_to_vmem [thread:$0]  %s84, 16, %s94, [#allocation3]
    %s97 = sld [smem:[#allocation4 + $0x3]]
    %s98 = smul.addr %s97, 16
    %s99 = scalar_lea.hbm %s3, %s98
    %s100 = scalar_lea.vmem [#allocation2], 3
    // Predicated region
    $region38: #{tpu_custom_call.1} parent=1 // pred_check
      _
    $region39: #{tpu_custom_call.1} parent=1 // pred_check_branch
      %102 = sbr.rel target = $region41
    $region40: #{tpu_custom_call.1} parent=1 // pred_region
      %103 = sst [smem:[#allocation14]] [#allocation21]
      %104 = sst [smem:[#allocation15]] [#allocation20]
    $region41: #{tpu_custom_call.1} parent=1 // pred_fallthru
      _
    %106 = shalt.err (0)
    %s108 = sshll.u32 %s100, 4
    %s109 = int_to_ptr.vmem [resolvable:$true] %s108
    %111 = dma.hbm_to_vmem [thread:$0]  %s99, 16, %s109, [#allocation3]
    %s112 = sld [smem:[#allocation4 + $0x4]]
    %s113 = smul.addr %s112, 16
    %s114 = scalar_lea.hbm %s3, %s113
    %s115 = scalar_lea.vmem [#allocation2], 4
    // Predicated region
    $region42: #{tpu_custom_call.1} parent=1 // pred_check
      _
    $region43: #{tpu_custom_call.1} parent=1 // pred_check_branch
      %117 = sbr.rel target = $region45
    $region44: #{tpu_custom_call.1} parent=1 // pred_region
      %118 = sst [smem:[#allocation14]] [#allocation23]
      %119 = sst [smem:[#allocation15]] [#allocation22]
    $region45: #{tpu_custom_call.1} parent=1 // pred_fallthru
      _
    %121 = shalt.err (0)
    %s123 = sshll.u32 %s115, 4
    %s124 = int_to_ptr.vmem [resolvable:$true] %s123
    %126 = dma.hbm_to_vmem [thread:$0]  %s114, 16, %s124, [#allocation3]
    %s127 = sld [smem:[#allocation4 + $0x5]]
    %s128 = smul.addr %s127, 16
    %s129 = scalar_lea.hbm %s3, %s128
    %s130 = scalar_lea.vmem [#allocation2], 5
    // Predicated region
    $region46: #{tpu_custom_call.1} parent=1 // pred_check
      _
    $region47: #{tpu_custom_call.1} parent=1 // pred_check_branch
      %132 = sbr.rel target = $region49
    $region48: #{tpu_custom_call.1} parent=1 // pred_region
      %133 = sst [smem:[#allocation14]] [#allocation25]
      %134 = sst [smem:[#allocation15]] [#allocation24]
    $region49: #{tpu_custom_call.1} parent=1 // pred_fallthru
      _
    %136 = shalt.err (0)
    %s138 = sshll.u32 %s130, 4
    %s139 = int_to_ptr.vmem [resolvable:$true] %s138
    %141 = dma.hbm_to_vmem [thread:$0]  %s129, 16, %s139, [#allocation3]
    %s142 = sld [smem:[#allocation4 + $0x6]]
    %s143 = smul.addr %s142, 16
    %s144 = scalar_lea.hbm %s3, %s143
    %s145 = scalar_lea.vmem [#allocation2], 6
    // Predicated region
    $region50: #{tpu_custom_call.1} parent=1 // pred_check
      _
    $region51: #{tpu_custom_call.1} parent=1 // pred_check_branch
      %147 = sbr.rel target = $region53
    $region52: #{tpu_custom_call.1} parent=1 // pred_region
      %148 = sst [smem:[#allocation14]] [#allocation27]
      %149 = sst [smem:[#allocation15]] [#allocation26]
    $region53: #{tpu_custom_call.1} parent=1 // pred_fallthru
      _
    %151 = shalt.err (0)
    %s153 = sshll.u32 %s145, 4
    %s154 = int_to_ptr.vmem [resolvable:$true] %s153
    %156 = dma.hbm_to_vmem [thread:$0]  %s144, 16, %s154, [#allocation3]
    %s157 = sld [smem:[#allocation4 + $0x7]]
    %s158 = smul.addr %s157, 16
    %s159 = scalar_lea.hbm %s3, %s158
    %s160 = scalar_lea.vmem [#allocation2], 7
    // Predicated region
    $region54: #{tpu_custom_call.1} parent=1 // pred_check
      _
    $region55: #{tpu_custom_call.1} parent=1 // pred_check_branch
      %162 = sbr.rel target = $region57
    $region56: #{tpu_custom_call.1} parent=1 // pred_region
      %163 = sst [smem:[#allocation14]] [#allocation29]
      %164 = sst [smem:[#allocation15]] [#allocation28]
    $region57: #{tpu_custom_call.1} parent=1 // pred_fallthru
      _
    %166 = shalt.err (0)
    %s168 = sshll.u32 %s160, 4
    %s169 = int_to_ptr.vmem [resolvable:$true] %s168
    %171 = dma.hbm_to_vmem [thread:$0]  %s159, 16, %s169, [#allocation3]
    %s172 = sld [smem:[#allocation4 + $0x8]]
    %s173 = smul.addr %s172, 16
    %s174 = scalar_lea.hbm %s3, %s173
    %s175 = scalar_lea.vmem [#allocation2], 8
    // Predicated region
    $region58: #{tpu_custom_call.1} parent=1 // pred_check
      _
    $region59: #{tpu_custom_call.1} parent=1 // pred_check_branch
      %177 = sbr.rel target = $region61
    $region60: #{tpu_custom_call.1} parent=1 // pred_region
      %178 = sst [smem:[#allocation14]] [#allocation31]
      %179 = sst [smem:[#allocation15]] [#allocation30]
    $region61: #{tpu_custom_call.1} parent=1 // pred_fallthru
      _
    %181 = shalt.err (0)
    %s183 = sshll.u32 %s175, 4
    %s184 = int_to_ptr.vmem [resolvable:$true] %s183
    %186 = dma.hbm_to_vmem [thread:$0]  %s174, 16, %s184, [#allocation3]
    %s187 = sld [smem:[#allocation4 + $0x9]]
    %s188 = smul.addr %s187, 16
    %s189 = scalar_lea.hbm %s3, %s188
    %s190 = scalar_lea.vmem [#allocation2], 9
    // Predicated region
    $region62: #{tpu_custom_call.1} parent=1 // pred_check
      _
    $region63: #{tpu_custom_call.1} parent=1 // pred_check_branch
      %192 = sbr.rel target = $region65
    $region64: #{tpu_custom_call.1} parent=1 // pred_region
      %193 = sst [smem:[#allocation14]] [#allocation33]
      %194 = sst [smem:[#allocation15]] [#allocation32]
    $region65: #{tpu_custom_call.1} parent=1 // pred_fallthru
      _
    %196 = shalt.err (0)
    %s198 = sshll.u32 %s190, 4
    %s199 = int_to_ptr.vmem [resolvable:$true] %s198
    %201 = dma.hbm_to_vmem [thread:$0]  %s189, 16, %s199, [#allocation3]
    %s202 = sld [smem:[#allocation4 + $0xa]]
    %s203 = smul.addr %s202, 16
    %s204 = scalar_lea.hbm %s3, %s203
    %s205 = scalar_lea.vmem [#allocation2], 10
    // Predicated region
    $region66: #{tpu_custom_call.1} parent=1 // pred_check
      _
    $region67: #{tpu_custom_call.1} parent=1 // pred_check_branch
      %207 = sbr.rel target = $region69
    $region68: #{tpu_custom_call.1} parent=1 // pred_region
      %208 = sst [smem:[#allocation14]] [#allocation35]
      %209 = sst [smem:[#allocation15]] [#allocation34]
    $region69: #{tpu_custom_call.1} parent=1 // pred_fallthru
      _
    %211 = shalt.err (0)
    %s213 = sshll.u32 %s205, 4
    %s214 = int_to_ptr.vmem [resolvable:$true] %s213
    %216 = dma.hbm_to_vmem [thread:$0]  %s204, 16, %s214, [#allocation3]
    %s217 = sld [smem:[#allocation4 + $0xb]]
    %s218 = smul.addr %s217, 16
    %s219 = scalar_lea.hbm %s3, %s218
    %s220 = scalar_lea.vmem [#allocation2], 11
    // Predicated region
    $region70: #{tpu_custom_call.1} parent=1 // pred_check
      _
    $region71: #{tpu_custom_call.1} parent=1 // pred_check_branch
      %222 = sbr.rel target = $region73
    $region72: #{tpu_custom_call.1} parent=1 // pred_region
      %223 = sst [smem:[#allocation14]] [#allocation37]
      %224 = sst [smem:[#allocation15]] [#allocation36]
    $region73: #{tpu_custom_call.1} parent=1 // pred_fallthru
      _
    %226 = shalt.err (0)
    %s228 = sshll.u32 %s220, 4
    %s229 = int_to_ptr.vmem [resolvable:$true] %s228
    %231 = dma.hbm_to_vmem [thread:$0]  %s219, 16, %s229, [#allocation3]
    %s232 = sld [smem:[#allocation4 + $0xc]]
    %s233 = smul.addr %s232, 16
    %s234 = scalar_lea.hbm %s3, %s233
    %s235 = scalar_lea.vmem [#allocation2], 12
    // Predicated region
    $region74: #{tpu_custom_call.1} parent=1 // pred_check
      _
    $region75: #{tpu_custom_call.1} parent=1 // pred_check_branch
      %237 = sbr.rel target = $region77
    $region76: #{tpu_custom_call.1} parent=1 // pred_region
      %238 = sst [smem:[#allocation14]] [#allocation39]
      %239 = sst [smem:[#allocation15]] [#allocation38]
    $region77: #{tpu_custom_call.1} parent=1 // pred_fallthru
      _
    %241 = shalt.err (0)
    %s243 = sshll.u32 %s235, 4
    %s244 = int_to_ptr.vmem [resolvable:$true] %s243
    %246 = dma.hbm_to_vmem [thread:$0]  %s234, 16, %s244, [#allocation3]
    %s247 = sld [smem:[#allocation4 + $0xd]]
    %s248 = smul.addr %s247, 16
    %s249 = scalar_lea.hbm %s3, %s248
    %s250 = scalar_lea.vmem [#allocation2], 13
    // Predicated region
    $region78: #{tpu_custom_call.1} parent=1 // pred_check
      _
    $region79: #{tpu_custom_call.1} parent=1 // pred_check_branch
      %252 = sbr.rel target = $region81
    $region80: #{tpu_custom_call.1} parent=1 // pred_region
      %253 = sst [smem:[#allocation14]] [#allocation41]
      %254 = sst [smem:[#allocation15]] [#allocation40]
    $region81: #{tpu_custom_call.1} parent=1 // pred_fallthru
      _
    %256 = shalt.err (0)
    %s258 = sshll.u32 %s250, 4
    %s259 = int_to_ptr.vmem [resolvable:$true] %s258
    %261 = dma.hbm_to_vmem [thread:$0]  %s249, 16, %s259, [#allocation3]
    %s262 = sld [smem:[#allocation4 + $0xe]]
    %s263 = smul.addr %s262, 16
    %s264 = scalar_lea.hbm %s3, %s263
    %s265 = scalar_lea.vmem [#allocation2], 14
    // Predicated region
    $region82: #{tpu_custom_call.1} parent=1 // pred_check
      _
    $region83: #{tpu_custom_call.1} parent=1 // pred_check_branch
      %267 = sbr.rel target = $region85
    $region84: #{tpu_custom_call.1} parent=1 // pred_region
      %268 = sst [smem:[#allocation14]] [#allocation43]
      %269 = sst [smem:[#allocation15]] [#allocation42]
    $region85: #{tpu_custom_call.1} parent=1 // pred_fallthru
      _
    %271 = shalt.err (0)
    %s273 = sshll.u32 %s265, 4
    %s274 = int_to_ptr.vmem [resolvable:$true] %s273
    %276 = dma.hbm_to_vmem [thread:$0]  %s264, 16, %s274, [#allocation3]
    %s277 = sld [smem:[#allocation4 + $0xf]]
    %s278 = smul.addr %s277, 16
    %s279 = scalar_lea.hbm %s3, %s278
    %s280 = scalar_lea.vmem [#allocation2], 15
    // Predicated region
    $region86: #{tpu_custom_call.1} parent=1 // pred_check
      _
    $region87: #{tpu_custom_call.1} parent=1 // pred_check_branch
      %282 = sbr.rel target = $region89
    $region88: #{tpu_custom_call.1} parent=1 // pred_region
      %283 = sst [smem:[#allocation14]] [#allocation45]
      %284 = sst [smem:[#allocation15]] [#allocation44]
    $region89: #{tpu_custom_call.1} parent=1 // pred_fallthru
      _
    %286 = shalt.err (0)
    %s288 = sshll.u32 %s280, 4
    %s289 = int_to_ptr.vmem [resolvable:$true] %s288
    %291 = dma.hbm_to_vmem [thread:$0]  %s279, 16, %s289, [#allocation3]
    %s292 = smul.u32 16, 1
    %s293 = sshll.u32 %s292, 4
    %294 = dma.done [#allocation3], %s293
    %v295 = vld [vmem:[#allocation10] sm:$0xff]
    %v296 = vld [vmem:[#allocation10 + $0x8] sm:$0xff]
    %v297 = vld [vmem:[#allocation10 + $0x10] sm:$0xff]
    %v298 = vld [vmem:[#allocation10 + $0x18] sm:$0xff]
    %v299 = vld [vmem:[#allocation2] sm:$0xff]
    %v300 = vld [vmem:[#allocation2 + $0x8] sm:$0xff]
    %301 = vmatprep.subr.mxu0 0.0
    %v302 = vand.u32 %v299, 4294901760
    %303 = vmatpush1.xpose.msra.mxu0 %v302
    %304 = vmatprep.subr.mxu0 0.0
    %v305 = vand.u32 %v300, 4294901760
    %306 = vmatpush1.xpose.msra.mxu0 %v305
    %307 = vmatprep.subr.mxu0 0.0
    %308 = vmatpush1.xpose.msra.mxu0 0.0
    %309 = vmatprep.subr.mxu0 0.0
    %310 = vmatpush1.xpose.msra.mxu0 0.0
    %311 = vmatprep.subr.mxu0 0.0
    %312 = vmatpush1.xpose.msra.mxu0 0.0
    %313 = vmatprep.subr.mxu0 0.0
    %314 = vmatpush1.xpose.msra.mxu0 0.0
    %315 = vmatprep.subr.mxu0 0.0
    %316 = vmatpush1.xpose.msra.mxu0 0.0
    %317 = vmatprep.subr.mxu0 0.0
    %318 = vmatpush1.xpose.msra.mxu0 0.0
    %319 = vmatprep.subr.mxu0 0.0
    %320 = vmatpush1.xpose.msra.mxu0 0.0
    %321 = vmatprep.subr.mxu0 0.0
    %322 = vmatpush1.xpose.msra.mxu0 0.0
    %323 = vmatprep.subr.mxu0 0.0
    %324 = vmatpush1.xpose.msra.mxu0 0.0
    %325 = vmatprep.subr.mxu0 0.0
    %326 = vmatpush1.xpose.msra.mxu0 0.0
    %327 = vmatprep.subr.mxu0 0.0
    %328 = vmatpush1.xpose.msra.mxu0 0.0
    %329 = vmatprep.subr.mxu0 0.0
    %330 = vmatpush1.xpose.msra.mxu0 0.0
    %331 = vmatprep.subr.mxu0 0.0
    %332 = vmatpush1.xpose.msra.mxu0 0.0
    %333 = vmatprep.subr.mxu0 0.0
    %334 = vmatpush1.xpose.msra.mxu0 0.0
    %335 = vmatprep.subr.mxu0 0.0
    %336 = vmatpush1.xpose.msra.mxu0 0.0
    %337 = vmatprep.subr.mxu0 0.0
    %338 = vmatpush1.xpose.msra.mxu0 0.0
    %339 = vmatprep.subr.mxu0 0.0
    %340 = vmatpush1.xpose.msra.mxu0 0.0
    %341 = vmatprep.subr.mxu0 0.0
    %342 = vmatpush1.xpose.msra.mxu0 0.0
    %343 = vmatprep.subr.mxu0 0.0
    %344 = vmatpush1.xpose.msra.mxu0 0.0
    %345 = vmatprep.subr.mxu0 0.0
    %346 = vmatpush1.xpose.msra.mxu0 0.0
    %347 = vmatprep.subr.mxu0 0.0
    %348 = vmatpush1.xpose.msra.mxu0 0.0
    %349 = vmatprep.subr.mxu0 0.0
    %350 = vmatpush1.xpose.msra.mxu0 0.0
    %351 = vmatprep.subr.mxu0 0.0
    %352 = vmatpush1.xpose.msra.mxu0 0.0
    %353 = vmatprep.subr.mxu0 0.0
    %354 = vmatpush1.xpose.msra.mxu0 0.0
    %355 = vmatprep.subr.mxu0 0.0
    %356 = vmatpush1.xpose.msra.mxu0 0.0
    %357 = vmatprep.subr.mxu0 0.0
    %358 = vmatpush1.xpose.msra.mxu0 0.0
    %359 = vmatprep.subr.mxu0 0.0
    %360 = vmatpush1.xpose.msra.mxu0 0.0
    %361 = vmatprep.subr.mxu0 0.0
    %362 = vmatpush1.xpose.msra.mxu0 0.0
    %363 = vmatprep.subr.mxu0 0.0
    %364 = vmatpush1.xpose.msra.mxu0 0.0
    %365 = vmatprep.subr.mxu0 0.0
    %366 = vmatpush1.xpose.msra.mxu0 0.0
    %367 = vmatprep.mubr.f32.mxu0 0.0
    %v368 = vand.u32 %v295, 4294901760
    %v369 = vsub.f32 %v295, %v368
    %v370 = vand.u32 %v369, 4294901760
    %v371 = vsub.f32 %v369, %v370
    %v372 = vand.u32 %v371, 4294901760
    %373 = vmatmul.mubr.f32.gmra.mrb[0].mxu0 %v372
    %v374 = vpop.f32.mrb[0].mxu0
    %v375 = vadd.f32 0.0, %v374
    %v376 = vpop.f32.mrb[0].mxu0
    %377 = vmatprep.mubr.f32.mxu0 0.0
    %v378 = vand.u32 %v296, 4294901760
    %v379 = vsub.f32 %v296, %v378
    %v380 = vand.u32 %v379, 4294901760
    %v381 = vsub.f32 %v379, %v380
    %v382 = vand.u32 %v381, 4294901760
    %383 = vmatmul.mubr.f32.gmra.mrb[0].mxu0 %v382
    %v384 = vpop.f32.mrb[0].mxu0
    %v385 = vadd.f32 0.0, %v384
    %v386 = vpop.f32.mrb[0].mxu0
    %387 = vmatprep.mubr.f32.mxu0 0.0
    %v388 = vand.u32 %v297, 4294901760
    %v389 = vsub.f32 %v297, %v388
    %v390 = vand.u32 %v389, 4294901760
    %v391 = vsub.f32 %v389, %v390
    %v392 = vand.u32 %v391, 4294901760
    %393 = vmatmul.mubr.f32.gmra.mrb[0].mxu0 %v392
    %v394 = vpop.f32.mrb[0].mxu0
    %v395 = vadd.f32 0.0, %v394
    %v396 = vpop.f32.mrb[0].mxu0
    %397 = vmatprep.mubr.f32.mxu0 0.0
    %v398 = vand.u32 %v298, 4294901760
    %v399 = vsub.f32 %v298, %v398
    %v400 = vand.u32 %v399, 4294901760
    %v401 = vsub.f32 %v399, %v400
    %v402 = vand.u32 %v401, 4294901760
    %403 = vmatmul.mubr.f32.gmra.mrb[0].mxu0 %v402
    %v404 = vpop.f32.mrb[0].mxu0
    %v405 = vadd.f32 0.0, %v404
    %v406 = vpop.f32.mrb[0].mxu0
    %407 = vdwg.mxu0
    %408 = vmatprep.subr.mxu0 0.0
    %v409 = vand.u32 %v299, 4294901760
    %v410 = vsub.f32 %v299, %v409
    %v411 = vand.u32 %v410, 4294901760
    %v412 = vsub.f32 %v410, %v411
    %v413 = vand.u32 %v412, 4294901760
    %414 = vmatpush1.xpose.msra.mxu0 %v413
    %415 = vmatprep.subr.mxu0 0.0
    %v416 = vand.u32 %v300, 4294901760
    %v417 = vsub.f32 %v300, %v416
    %v418 = vand.u32 %v417, 4294901760
    %v419 = vsub.f32 %v417, %v418
    %v420 = vand.u32 %v419, 4294901760
    %421 = vmatpush1.xpose.msra.mxu0 %v420
    %422 = vmatprep.subr.mxu0 0.0
    %423 = vmatpush1.xpose.msra.mxu0 0.0
    %424 = vmatprep.subr.mxu0 0.0
    %425 = vmatpush1.xpose.msra.mxu0 0.0
    %426 = vmatprep.subr.mxu0 0.0
    %427 = vmatpush1.xpose.msra.mxu0 0.0
    %428 = vmatprep.subr.mxu0 0.0
    %429 = vmatpush1.xpose.msra.mxu0 0.0
    %430 = vmatprep.subr.mxu0 0.0
    %431 = vmatpush1.xpose.msra.mxu0 0.0
    %432 = vmatprep.subr.mxu0 0.0
    %433 = vmatpush1.xpose.msra.mxu0 0.0
    %434 = vmatprep.subr.mxu0 0.0
    %435 = vmatpush1.xpose.msra.mxu0 0.0
    %436 = vmatprep.subr.mxu0 0.0
    %437 = vmatpush1.xpose.msra.mxu0 0.0
    %438 = vmatprep.subr.mxu0 0.0
    %439 = vmatpush1.xpose.msra.mxu0 0.0
    %440 = vmatprep.subr.mxu0 0.0
    %441 = vmatpush1.xpose.msra.mxu0 0.0
    %442 = vmatprep.subr.mxu0 0.0
    %443 = vmatpush1.xpose.msra.mxu0 0.0
    %444 = vmatprep.subr.mxu0 0.0
    %445 = vmatpush1.xpose.msra.mxu0 0.0
    %446 = vmatprep.subr.mxu0 0.0
    %447 = vmatpush1.xpose.msra.mxu0 0.0
    %448 = vmatprep.subr.mxu0 0.0
    %449 = vmatpush1.xpose.msra.mxu0 0.0
    %450 = vmatprep.subr.mxu0 0.0
    %451 = vmatpush1.xpose.msra.mxu0 0.0
    %452 = vmatprep.subr.mxu0 0.0
    %453 = vmatpush1.xpose.msra.mxu0 0.0
    %454 = vmatprep.subr.mxu0 0.0
    %455 = vmatpush1.xpose.msra.mxu0 0.0
    %456 = vmatprep.subr.mxu0 0.0
    %457 = vmatpush1.xpose.msra.mxu0 0.0
    %458 = vmatprep.subr.mxu0 0.0
    %459 = vmatpush1.xpose.msra.mxu0 0.0
    %460 = vmatprep.subr.mxu0 0.0
    %461 = vmatpush1.xpose.msra.mxu0 0.0
    %462 = vmatprep.subr.mxu0 0.0
    %463 = vmatpush1.xpose.msra.mxu0 0.0
    %464 = vmatprep.subr.mxu0 0.0
    %465 = vmatpush1.xpose.msra.mxu0 0.0
    %466 = vmatprep.subr.mxu0 0.0
    %467 = vmatpush1.xpose.msra.mxu0 0.0
    %468 = vmatprep.subr.mxu0 0.0
    %469 = vmatpush1.xpose.msra.mxu0 0.0
    %470 = vmatprep.subr.mxu0 0.0
    %471 = vmatpush1.xpose.msra.mxu0 0.0
    %472 = vmatprep.subr.mxu0 0.0
    %473 = vmatpush1.xpose.msra.mxu0 0.0
    %474 = vmatprep.subr.mxu0 0.0
    %475 = vmatpush1.xpose.msra.mxu0 0.0
    %476 = vmatprep.subr.mxu0 0.0
    %477 = vmatpush1.xpose.msra.mxu0 0.0
    %478 = vmatprep.subr.mxu0 0.0
    %479 = vmatpush1.xpose.msra.mxu0 0.0
    %480 = vmatprep.subr.mxu0 0.0
    %481 = vmatpush1.xpose.msra.mxu0 0.0
    %482 = vmatprep.mubr.f32.mxu0 0.0
    %v483 = vand.u32 %v295, 4294901760
    %484 = vmatmul.mubr.f32.gmra.mrb[0].mxu0 %v483
    %v485 = vpop.f32.mrb[0].mxu0
    %v486 = vadd.f32 %v375, %v485
    %v487 = vpop.f32.mrb[0].mxu0
    %488 = vmatprep.mubr.f32.mxu0 0.0
    %v489 = vand.u32 %v296, 4294901760
    %490 = vmatmul.mubr.f32.gmra.mrb[0].mxu0 %v489
    %v491 = vpop.f32.mrb[0].mxu0
    %v492 = vadd.f32 %v385, %v491
    %v493 = vpop.f32.mrb[0].mxu0
    %494 = vmatprep.mubr.f32.mxu0 0.0
    %v495 = vand.u32 %v297, 4294901760
    %496 = vmatmul.mubr.f32.gmra.mrb[0].mxu0 %v495
    %v497 = vpop.f32.mrb[0].mxu0
    %v498 = vadd.f32 %v395, %v497
    %v499 = vpop.f32.mrb[0].mxu0
    %500 = vmatprep.mubr.f32.mxu0 0.0
    %v501 = vand.u32 %v298, 4294901760
    %502 = vmatmul.mubr.f32.gmra.mrb[0].mxu0 %v501
    %v503 = vpop.f32.mrb[0].mxu0
    %v504 = vadd.f32 %v405, %v503
    %v505 = vpop.f32.mrb[0].mxu0
    %506 = vdwg.mxu0
    %507 = vmatprep.subr.mxu0 0.0
    %v508 = vand.u32 %v299, 4294901760
    %v509 = vsub.f32 %v299, %v508
    %510 = vmatpush1.xpose.msra.mxu0 %v509
    %511 = vmatprep.subr.mxu0 0.0
    %v512 = vand.u32 %v300, 4294901760
    %v513 = vsub.f32 %v300, %v512
    %514 = vmatpush1.xpose.msra.mxu0 %v513
    %515 = vmatprep.subr.mxu0 0.0
    %516 = vmatpush1.xpose.msra.mxu0 0.0
    %517 = vmatprep.subr.mxu0 0.0
    %518 = vmatpush1.xpose.msra.mxu0 0.0
    %519 = vmatprep.subr.mxu0 0.0
    %520 = vmatpush1.xpose.msra.mxu0 0.0
    %521 = vmatprep.subr.mxu0 0.0
    %522 = vmatpush1.xpose.msra.mxu0 0.0
    %523 = vmatprep.subr.mxu0 0.0
    %524 = vmatpush1.xpose.msra.mxu0 0.0
    %525 = vmatprep.subr.mxu0 0.0
    %526 = vmatpush1.xpose.msra.mxu0 0.0
    %527 = vmatprep.subr.mxu0 0.0
    %528 = vmatpush1.xpose.msra.mxu0 0.0
    %529 = vmatprep.subr.mxu0 0.0
    %530 = vmatpush1.xpose.msra.mxu0 0.0
    %531 = vmatprep.subr.mxu0 0.0
    %532 = vmatpush1.xpose.msra.mxu0 0.0
    %533 = vmatprep.subr.mxu0 0.0
    %534 = vmatpush1.xpose.msra.mxu0 0.0
    %535 = vmatprep.subr.mxu0 0.0
    %536 = vmatpush1.xpose.msra.mxu0 0.0
    %537 = vmatprep.subr.mxu0 0.0
    %538 = vmatpush1.xpose.msra.mxu0 0.0
    %539 = vmatprep.subr.mxu0 0.0
    %540 = vmatpush1.xpose.msra.mxu0 0.0
    %541 = vmatprep.subr.mxu0 0.0
    %542 = vmatpush1.xpose.msra.mxu0 0.0
    %543 = vmatprep.subr.mxu0 0.0
    %544 = vmatpush1.xpose.msra.mxu0 0.0
    %545 = vmatprep.subr.mxu0 0.0
    %546 = vmatpush1.xpose.msra.mxu0 0.0
    %547 = vmatprep.subr.mxu0 0.0
    %548 = vmatpush1.xpose.msra.mxu0 0.0
    %549 = vmatprep.subr.mxu0 0.0
    %550 = vmatpush1.xpose.msra.mxu0 0.0
    %551 = vmatprep.subr.mxu0 0.0
    %552 = vmatpush1.xpose.msra.mxu0 0.0
    %553 = vmatprep.subr.mxu0 0.0
    %554 = vmatpush1.xpose.msra.mxu0 0.0
    %555 = vmatprep.subr.mxu0 0.0
    %556 = vmatpush1.xpose.msra.mxu0 0.0
    %557 = vmatprep.subr.mxu0 0.0
    %558 = vmatpush1.xpose.msra.mxu0 0.0
    %559 = vmatprep.subr.mxu0 0.0
    %560 = vmatpush1.xpose.msra.mxu0 0.0
    %561 = vmatprep.subr.mxu0 0.0
    %562 = vmatpush1.xpose.msra.mxu0 0.0
    %563 = vmatprep.subr.mxu0 0.0
    %564 = vmatpush1.xpose.msra.mxu0 0.0
    %565 = vmatprep.subr.mxu0 0.0
    %566 = vmatpush1.xpose.msra.mxu0 0.0
    %567 = vmatprep.subr.mxu0 0.0
    %568 = vmatpush1.xpose.msra.mxu0 0.0
    %569 = vmatprep.subr.mxu0 0.0
    %570 = vmatpush1.xpose.msra.mxu0 0.0
    %571 = vmatprep.subr.mxu0 0.0
    %572 = vmatpush1.xpose.msra.mxu0 0.0
    %573 = vmatprep.subr.mxu0 0.0
    %574 = vmatpush1.xpose.msra.mxu0 0.0
    %575 = vmatprep.mubr.f32.mxu0 0.0
    %v576 = vand.u32 %v295, 4294901760
    %v577 = vsub.f32 %v295, %v576
    %578 = vmatmul.mubr.f32.gmra.mrb[0].mxu0 %v577
    %v579 = vpop.f32.mrb[0].mxu0
    %v580 = vadd.f32 %v486, %v579
    %v581 = vpop.f32.mrb[0].mxu0
    %582 = vmatprep.mubr.f32.mxu0 0.0
    %v583 = vand.u32 %v296, 4294901760
    %v584 = vsub.f32 %v296, %v583
    %585 = vmatmul.mubr.f32.gmra.mrb[0].mxu0 %v584
    %v586 = vpop.f32.mrb[0].mxu0
    %v587 = vadd.f32 %v492, %v586
    %v588 = vpop.f32.mrb[0].mxu0
    %589 = vmatprep.mubr.f32.mxu0 0.0
    %v590 = vand.u32 %v297, 4294901760
    %v591 = vsub.f32 %v297, %v590
    %592 = vmatmul.mubr.f32.gmra.mrb[0].mxu0 %v591
    %v593 = vpop.f32.mrb[0].mxu0
    %v594 = vadd.f32 %v498, %v593
    %v595 = vpop.f32.mrb[0].mxu0
    %596 = vmatprep.mubr.f32.mxu0 0.0
    %v597 = vand.u32 %v298, 4294901760
    %v598 = vsub.f32 %v298, %v597
    %599 = vmatmul.mubr.f32.gmra.mrb[0].mxu0 %v598
    %v600 = vpop.f32.mrb[0].mxu0
    %v601 = vadd.f32 %v504, %v600
    %v602 = vpop.f32.mrb[0].mxu0
    %603 = vdwg.mxu0
    %604 = vmatprep.subr.mxu0 0.0
    %v605 = vand.u32 %v299, 4294901760
    %606 = vmatpush1.xpose.msra.mxu0 %v605
    %607 = vmatprep.subr.mxu0 0.0
    %v608 = vand.u32 %v300, 4294901760
    %609 = vmatpush1.xpose.msra.mxu0 %v608
    %610 = vmatprep.subr.mxu0 0.0
    %611 = vmatpush1.xpose.msra.mxu0 0.0
    %612 = vmatprep.subr.mxu0 0.0
    %613 = vmatpush1.xpose.msra.mxu0 0.0
    %614 = vmatprep.subr.mxu0 0.0
    %615 = vmatpush1.xpose.msra.mxu0 0.0
    %616 = vmatprep.subr.mxu0 0.0
    %617 = vmatpush1.xpose.msra.mxu0 0.0
    %618 = vmatprep.subr.mxu0 0.0
    %619 = vmatpush1.xpose.msra.mxu0 0.0
    %620 = vmatprep.subr.mxu0 0.0
    %621 = vmatpush1.xpose.msra.mxu0 0.0
    %622 = vmatprep.subr.mxu0 0.0
    %623 = vmatpush1.xpose.msra.mxu0 0.0
    %624 = vmatprep.subr.mxu0 0.0
    %625 = vmatpush1.xpose.msra.mxu0 0.0
    %626 = vmatprep.subr.mxu0 0.0
    %627 = vmatpush1.xpose.msra.mxu0 0.0
    %628 = vmatprep.subr.mxu0 0.0
    %629 = vmatpush1.xpose.msra.mxu0 0.0
    %630 = vmatprep.subr.mxu0 0.0
    %631 = vmatpush1.xpose.msra.mxu0 0.0
    %632 = vmatprep.subr.mxu0 0.0
    %633 = vmatpush1.xpose.msra.mxu0 0.0
    %634 = vmatprep.subr.mxu0 0.0
    %635 = vmatpush1.xpose.msra.mxu0 0.0
    %636 = vmatprep.subr.mxu0 0.0
    %637 = vmatpush1.xpose.msra.mxu0 0.0
    %638 = vmatprep.subr.mxu0 0.0
    %639 = vmatpush1.xpose.msra.mxu0 0.0
    %640 = vmatprep.subr.mxu0 0.0
    %641 = vmatpush1.xpose.msra.mxu0 0.0
    %642 = vmatprep.subr.mxu0 0.0
    %643 = vmatpush1.xpose.msra.mxu0 0.0
    %644 = vmatprep.subr.mxu0 0.0
    %645 = vmatpush1.xpose.msra.mxu0 0.0
    %646 = vmatprep.subr.mxu0 0.0
    %647 = vmatpush1.xpose.msra.mxu0 0.0
    %648 = vmatprep.subr.mxu0 0.0
    %649 = vmatpush1.xpose.msra.mxu0 0.0
    %650 = vmatprep.subr.mxu0 0.0
    %651 = vmatpush1.xpose.msra.mxu0 0.0
    %652 = vmatprep.subr.mxu0 0.0
    %653 = vmatpush1.xpose.msra.mxu0 0.0
    %654 = vmatprep.subr.mxu0 0.0
    %655 = vmatpush1.xpose.msra.mxu0 0.0
    %656 = vmatprep.subr.mxu0 0.0
    %657 = vmatpush1.xpose.msra.mxu0 0.0
    %658 = vmatprep.subr.mxu0 0.0
    %659 = vmatpush1.xpose.msra.mxu0 0.0
    %660 = vmatprep.subr.mxu0 0.0
    %661 = vmatpush1.xpose.msra.mxu0 0.0
    %662 = vmatprep.subr.mxu0 0.0
    %663 = vmatpush1.xpose.msra.mxu0 0.0
    %664 = vmatprep.subr.mxu0 0.0
    %665 = vmatpush1.xpose.msra.mxu0 0.0
    %666 = vmatprep.subr.mxu0 0.0
    %667 = vmatpush1.xpose.msra.mxu0 0.0
    %668 = vmatprep.subr.mxu0 0.0
    %669 = vmatpush1.xpose.msra.mxu0 0.0
    %670 = vmatprep.mubr.f32.mxu0 0.0
    %v671 = vand.u32 %v295, 4294901760
    %v672 = vsub.f32 %v295, %v671
    %v673 = vand.u32 %v672, 4294901760
    %674 = vmatmul.mubr.f32.gmra.mrb[0].mxu0 %v673
    %v675 = vpop.f32.mrb[0].mxu0
    %v676 = vadd.f32 %v580, %v675
    %v677 = vpop.f32.mrb[0].mxu0
    %678 = vmatprep.mubr.f32.mxu0 0.0
    %v679 = vand.u32 %v296, 4294901760
    %v680 = vsub.f32 %v296, %v679
    %v681 = vand.u32 %v680, 4294901760
    %682 = vmatmul.mubr.f32.gmra.mrb[0].mxu0 %v681
    %v683 = vpop.f32.mrb[0].mxu0
    %v684 = vadd.f32 %v587, %v683
    %v685 = vpop.f32.mrb[0].mxu0
    %686 = vmatprep.mubr.f32.mxu0 0.0
    %v687 = vand.u32 %v297, 4294901760
    %v688 = vsub.f32 %v297, %v687
    %v689 = vand.u32 %v688, 4294901760
    %690 = vmatmul.mubr.f32.gmra.mrb[0].mxu0 %v689
    %v691 = vpop.f32.mrb[0].mxu0
    %v692 = vadd.f32 %v594, %v691
    %v693 = vpop.f32.mrb[0].mxu0
    %694 = vmatprep.mubr.f32.mxu0 0.0
    %v695 = vand.u32 %v298, 4294901760
    %v696 = vsub.f32 %v298, %v695
    %v697 = vand.u32 %v696, 4294901760
    %698 = vmatmul.mubr.f32.gmra.mrb[0].mxu0 %v697
    %v699 = vpop.f32.mrb[0].mxu0
    %v700 = vadd.f32 %v601, %v699
    %v701 = vpop.f32.mrb[0].mxu0
    %702 = vdwg.mxu0
    %703 = vmatprep.subr.mxu0 0.0
    %v704 = vand.u32 %v299, 4294901760
    %v705 = vsub.f32 %v299, %v704
    %v706 = vand.u32 %v705, 4294901760
    %707 = vmatpush1.xpose.msra.mxu0 %v706
    %708 = vmatprep.subr.mxu0 0.0
    %v709 = vand.u32 %v300, 4294901760
    %v710 = vsub.f32 %v300, %v709
    %v711 = vand.u32 %v710, 4294901760
    %712 = vmatpush1.xpose.msra.mxu0 %v711
    %713 = vmatprep.subr.mxu0 0.0
    %714 = vmatpush1.xpose.msra.mxu0 0.0
    %715 = vmatprep.subr.mxu0 0.0
    %716 = vmatpush1.xpose.msra.mxu0 0.0
    %717 = vmatprep.subr.mxu0 0.0
    %718 = vmatpush1.xpose.msra.mxu0 0.0
    %719 = vmatprep.subr.mxu0 0.0
    %720 = vmatpush1.xpose.msra.mxu0 0.0
    %721 = vmatprep.subr.mxu0 0.0
    %722 = vmatpush1.xpose.msra.mxu0 0.0
    %723 = vmatprep.subr.mxu0 0.0
    %724 = vmatpush1.xpose.msra.mxu0 0.0
    %725 = vmatprep.subr.mxu0 0.0
    %726 = vmatpush1.xpose.msra.mxu0 0.0
    %727 = vmatprep.subr.mxu0 0.0
    %728 = vmatpush1.xpose.msra.mxu0 0.0
    %729 = vmatprep.subr.mxu0 0.0
    %730 = vmatpush1.xpose.msra.mxu0 0.0
    %731 = vmatprep.subr.mxu0 0.0
    %732 = vmatpush1.xpose.msra.mxu0 0.0
    %733 = vmatprep.subr.mxu0 0.0
    %734 = vmatpush1.xpose.msra.mxu0 0.0
    %735 = vmatprep.subr.mxu0 0.0
    %736 = vmatpush1.xpose.msra.mxu0 0.0
    %737 = vmatprep.subr.mxu0 0.0
    %738 = vmatpush1.xpose.msra.mxu0 0.0
    %739 = vmatprep.subr.mxu0 0.0
    %740 = vmatpush1.xpose.msra.mxu0 0.0
    %741 = vmatprep.subr.mxu0 0.0
    %742 = vmatpush1.xpose.msra.mxu0 0.0
    %743 = vmatprep.subr.mxu0 0.0
    %744 = vmatpush1.xpose.msra.mxu0 0.0
    %745 = vmatprep.subr.mxu0 0.0
    %746 = vmatpush1.xpose.msra.mxu0 0.0
    %747 = vmatprep.subr.mxu0 0.0
    %748 = vmatpush1.xpose.msra.mxu0 0.0
    %749 = vmatprep.subr.mxu0 0.0
    %750 = vmatpush1.xpose.msra.mxu0 0.0
    %751 = vmatprep.subr.mxu0 0.0
    %752 = vmatpush1.xpose.msra.mxu0 0.0
    %753 = vmatprep.subr.mxu0 0.0
    %754 = vmatpush1.xpose.msra.mxu0 0.0
    %755 = vmatprep.subr.mxu0 0.0
    %756 = vmatpush1.xpose.msra.mxu0 0.0
    %757 = vmatprep.subr.mxu0 0.0
    %758 = vmatpush1.xpose.msra.mxu0 0.0
    %759 = vmatprep.subr.mxu0 0.0
    %760 = vmatpush1.xpose.msra.mxu0 0.0
    %761 = vmatprep.subr.mxu0 0.0
    %762 = vmatpush1.xpose.msra.mxu0 0.0
    %763 = vmatprep.subr.mxu0 0.0
    %764 = vmatpush1.xpose.msra.mxu0 0.0
    %765 = vmatprep.subr.mxu0 0.0
    %766 = vmatpush1.xpose.msra.mxu0 0.0
    %767 = vmatprep.subr.mxu0 0.0
    %768 = vmatpush1.xpose.msra.mxu0 0.0
    %769 = vmatprep.subr.mxu0 0.0
    %770 = vmatpush1.xpose.msra.mxu0 0.0
    %771 = vmatprep.subr.mxu0 0.0
    %772 = vmatpush1.xpose.msra.mxu0 0.0
    %773 = vmatprep.mubr.f32.mxu0 0.0
    %v774 = vand.u32 %v295, 4294901760
    %775 = vmatmul.mubr.f32.gmra.mrb[0].mxu0 %v774
    %v776 = vpop.f32.mrb[0].mxu0
    %v777 = vadd.f32 %v676, %v776
    %v778 = vpop.f32.mrb[0].mxu0
    %779 = vmatprep.mubr.f32.mxu0 0.0
    %v780 = vand.u32 %v296, 4294901760
    %781 = vmatmul.mubr.f32.gmra.mrb[0].mxu0 %v780
    %v782 = vpop.f32.mrb[0].mxu0
    %v783 = vadd.f32 %v684, %v782
    %v784 = vpop.f32.mrb[0].mxu0
    %785 = vmatprep.mubr.f32.mxu0 0.0
    %v786 = vand.u32 %v297, 4294901760
    %787 = vmatmul.mubr.f32.gmra.mrb[0].mxu0 %v786
    %v788 = vpop.f32.mrb[0].mxu0
    %v789 = vadd.f32 %v692, %v788
    %v790 = vpop.f32.mrb[0].mxu0
    %791 = vmatprep.mubr.f32.mxu0 0.0
    %v792 = vand.u32 %v298, 4294901760
    %793 = vmatmul.mubr.f32.gmra.mrb[0].mxu0 %v792
    %v794 = vpop.f32.mrb[0].mxu0
    %v795 = vadd.f32 %v700, %v794
    %v796 = vpop.f32.mrb[0].mxu0
    %797 = vdwg.mxu0
    %798 = vmatprep.subr.mxu0 0.0
    %v799 = vand.u32 %v299, 4294901760
    %800 = vmatpush1.xpose.msra.mxu0 %v799
    %801 = vmatprep.subr.mxu0 0.0
    %v802 = vand.u32 %v300, 4294901760
    %803 = vmatpush1.xpose.msra.mxu0 %v802
    %804 = vmatprep.subr.mxu0 0.0
    %805 = vmatpush1.xpose.msra.mxu0 0.0
    %806 = vmatprep.subr.mxu0 0.0
    %807 = vmatpush1.xpose.msra.mxu0 0.0
    %808 = vmatprep.subr.mxu0 0.0
    %809 = vmatpush1.xpose.msra.mxu0 0.0
    %810 = vmatprep.subr.mxu0 0.0
    %811 = vmatpush1.xpose.msra.mxu0 0.0
    %812 = vmatprep.subr.mxu0 0.0
    %813 = vmatpush1.xpose.msra.mxu0 0.0
    %814 = vmatprep.subr.mxu0 0.0
    %815 = vmatpush1.xpose.msra.mxu0 0.0
    %816 = vmatprep.subr.mxu0 0.0
    %817 = vmatpush1.xpose.msra.mxu0 0.0
    %818 = vmatprep.subr.mxu0 0.0
    %819 = vmatpush1.xpose.msra.mxu0 0.0
    %820 = vmatprep.subr.mxu0 0.0
    %821 = vmatpush1.xpose.msra.mxu0 0.0
    %822 = vmatprep.subr.mxu0 0.0
    %823 = vmatpush1.xpose.msra.mxu0 0.0
    %824 = vmatprep.subr.mxu0 0.0
    %825 = vmatpush1.xpose.msra.mxu0 0.0
    %826 = vmatprep.subr.mxu0 0.0
    %827 = vmatpush1.xpose.msra.mxu0 0.0
    %828 = vmatprep.subr.mxu0 0.0
    %829 = vmatpush1.xpose.msra.mxu0 0.0
    %830 = vmatprep.subr.mxu0 0.0
    %831 = vmatpush1.xpose.msra.mxu0 0.0
    %832 = vmatprep.subr.mxu0 0.0
    %833 = vmatpush1.xpose.msra.mxu0 0.0
    %834 = vmatprep.subr.mxu0 0.0
    %835 = vmatpush1.xpose.msra.mxu0 0.0
    %836 = vmatprep.subr.mxu0 0.0
    %837 = vmatpush1.xpose.msra.mxu0 0.0
    %838 = vmatprep.subr.mxu0 0.0
    %839 = vmatpush1.xpose.msra.mxu0 0.0
    %840 = vmatprep.subr.mxu0 0.0
    %841 = vmatpush1.xpose.msra.mxu0 0.0
    %842 = vmatprep.subr.mxu0 0.0
    %843 = vmatpush1.xpose.msra.mxu0 0.0
    %844 = vmatprep.subr.mxu0 0.0
    %845 = vmatpush1.xpose.msra.mxu0 0.0
    %846 = vmatprep.subr.mxu0 0.0
    %847 = vmatpush1.xpose.msra.mxu0 0.0
    %848 = vmatprep.subr.mxu0 0.0
    %849 = vmatpush1.xpose.msra.mxu0 0.0
    %850 = vmatprep.subr.mxu0 0.0
    %851 = vmatpush1.xpose.msra.mxu0 0.0
    %852 = vmatprep.subr.mxu0 0.0
    %853 = vmatpush1.xpose.msra.mxu0 0.0
    %854 = vmatprep.subr.mxu0 0.0
    %855 = vmatpush1.xpose.msra.mxu0 0.0
    %856 = vmatprep.subr.mxu0 0.0
    %857 = vmatpush1.xpose.msra.mxu0 0.0
    %858 = vmatprep.subr.mxu0 0.0
    %859 = vmatpush1.xpose.msra.mxu0 0.0
    %860 = vmatprep.subr.mxu0 0.0
    %861 = vmatpush1.xpose.msra.mxu0 0.0
    %862 = vmatprep.subr.mxu0 0.0
    %863 = vmatpush1.xpose.msra.mxu0 0.0
    %864 = vmatprep.mubr.f32.mxu0 0.0
    %v865 = vand.u32 %v295, 4294901760
    %866 = vmatmul.mubr.f32.gmra.mrb[0].mxu0 %v865
    %v867 = vpop.f32.mrb[0].mxu0
    %v868 = vadd.f32 %v777, %v867
    %v869 = vpop.f32.mrb[0].mxu0
    %870 = vmatprep.mubr.f32.mxu0 0.0
    %v871 = vand.u32 %v296, 4294901760
    %872 = vmatmul.mubr.f32.gmra.mrb[0].mxu0 %v871
    %v873 = vpop.f32.mrb[0].mxu0
    %v874 = vadd.f32 %v783, %v873
    %v875 = vpop.f32.mrb[0].mxu0
    %876 = vmatprep.mubr.f32.mxu0 0.0
    %v877 = vand.u32 %v297, 4294901760
    %878 = vmatmul.mubr.f32.gmra.mrb[0].mxu0 %v877
    %v879 = vpop.f32.mrb[0].mxu0
    %v880 = vadd.f32 %v789, %v879
    %v881 = vpop.f32.mrb[0].mxu0
    %882 = vmatprep.mubr.f32.mxu0 0.0
    %v883 = vand.u32 %v298, 4294901760
    %884 = vmatmul.mubr.f32.gmra.mrb[0].mxu0 %v883
    %v885 = vpop.f32.mrb[0].mxu0
    %v886 = vadd.f32 %v795, %v885
    %v887 = vpop.f32.mrb[0].mxu0
    %888 = vdwg.mxu0
    %893 = vrot.lane.b32.xlu0 %v868, 120
    %v894 = vpop.permute.xlu0 %893
    %895 = vrot.lane.b32.xlu0 %v874, 120
    %v896 = vpop.permute.xlu0 %895
    %897 = vrot.lane.b32.xlu0 %v880, 120
    %v898 = vpop.permute.xlu0 %897
    %899 = vrot.lane.b32.xlu0 %v886, 120
    %v900 = vpop.permute.xlu0 %899
    %v905 = vsub.f32 %v868, %v894
    %v906 = vsub.f32 %v874, %v896
    %v907 = vsub.f32 %v880, %v898
    %v908 = vsub.f32 %v886, %v900
    %v909 = vmul.f32 %v905, %v905
    %v910 = vmul.f32 %v906, %v906
    %v911 = vmul.f32 %v907, %v907
    %v912 = vmul.f32 %v908, %v908
    %vm913 = vcmask 64512
    %v914 = vsel %vm913, %v909, 0.0
    %v915 = vsel %vm913, %v910, 0.0
    %v916 = vadd.f32 %v914, %v915
    %v917 = vsel %vm913, %v911, 0.0
    %v918 = vadd.f32 %v916, %v917
    %v919 = vsel %vm913, %v912, 0.0
    %v920 = vadd.f32 %v918, %v919
    %v921 = vrot.slane %v920, 4
    %v922 = vadd.f32 %v920, %v921
    %v923 = vrot.slane %v922, 2
    %v924 = vadd.f32 %v922, %v923
    %v925 = vrot.slane %v924, 1
    %v926 = vadd.f32 %v924, %v925
    %s927 = sld [smem:[#allocation9]]
    %s928 = sld [smem:[#allocation9 + $0x1]]
    %v929 = vstv %s928
    %v930 = vmul.f32 %v929, %v926
    %v931 = vstv %s927
    %v932 = vsub.f32 %v931, %v930
    %v933 = vxor.u32 %v932, 2147483648
    %v934 = vmul.f32 %v933, 1.442695
    %v935 = vpow.pop %v934
    %v936 = vadd.f32 %v935, 1.0
    %v937 = vrcp.pop %v936
    %v938 = vmul.f32 1.0, %v937
    %vm939 = vcmask 57344
    %940 = vst.msk [vmem:[#allocation11] sm:$0x1] %vm939, %v938
    // Predicated region
    $region90: #{tpu_custom_call.1} parent=1 // pred_check
      _
    $region91: #{tpu_custom_call.1} parent=1 // pred_check_branch
      %942 = sbr.rel (0) target = $region93
    $region92: #{tpu_custom_call.1} parent=1 // pred_region
      %s944 = ssub.s32 16, 16
      %945 = vsyncadd [#allocation6], %s944
      %s947 = sshll.u32 [#allocation11], 4
      %s948 = int_to_ptr.vmem [resolvable:$true] %s947
      %950 = dma.vmem_to_hbm [thread:$0]  %s948, 16, %s4, [#allocation6]
    $region93: #{tpu_custom_call.1} parent=1 // pred_fallthru
      _
    // Predicated region
    $region94: #{tpu_custom_call.1} parent=1 // pred_check
      _
    $region95: #{tpu_custom_call.1} parent=1 // pred_check_branch
      %952 = sbr.rel (0) target = $region97
    $region96: #{tpu_custom_call.1} parent=1 // pred_region
      %953 = dma.done [#allocation6], 16
    $region97: #{tpu_custom_call.1} parent=1 // pred_fallthru
      _
    %954 = vsyncpa [#allocation5], 1
    %955 = vsyncpa [#allocation6], 1
    %956 = vsyncpa [#allocation7], 1
    %957 = vsyncpa [#allocation8], 1
  %958 = vsyncmov [#allocation3]
  %s959 = vpop.sfrf %958
  %p960 = scmp.eq.s32.totalorder %s959, 0
  %p961 = pneg %p960
  %963 = shalt.err (%p961)

</llo_original>
